<compile_context>
chip_gen: v6e
topology: v6e:2x2x1
jax: 0.10.0
libtpu: 0.0.40
codegen_flags: <defaults>
</compile_context>

<pallas_src>
import functools

import jax
import jax.numpy as jnp
from jax.experimental import pallas as pl
from jax.experimental.pallas import tpu as pltpu

_VMEM_LIMIT_BYTES = 32 * 1024 * 1024   # safe on v5e/v6e/v7x
_TILE_BUDGET_BYTES = 24 * 1024 * 1024  # budget for pipelined blocks (headroom kept)


def _round_up(x: int, m: int) -> int:
    return ((x + m - 1) // m) * m


def _choose_tile_rows(rows: int, feats: int, n_streams: int,
                      requested: int | None = None) -> int:
    """Pick the largest row tile that fits the VMEM budget.

    n_streams = number of (rows, feats) arrays moving through the pipeline
    (inputs + outputs). Each is double-buffered by BlockSpec pipelining.
    """
    bytes_per_row = n_streams * 2 * feats * 4  # double buffer, f32 upper bound
    cap = max(16, _TILE_BUDGET_BYTES // max(bytes_per_row, 1))
    tile = requested if requested is not None else 512
    tile = min(tile, cap, 1024)
    # Don't tile far beyond the actual number of rows (small inputs).
    tile = min(tile, _round_up(rows, 16))
    # Multiple of 16 keeps bf16 sublane packing full-width (covers f32 too).
    tile = max(16, (tile // 16) * 16)
    return tile


def _pad_rows(x2d, tile_rows):
    rows = x2d.shape[0]
    padded = _round_up(rows, tile_rows)
    if padded != rows:
        x2d = jnp.pad(x2d, ((0, padded - rows), (0, 0)))
    return x2d, padded


# ---------------------------------------------------------------------------
# LayerNormalization kernel (torch .std() is unbiased; eps added to std).
# ---------------------------------------------------------------------------
def _layernorm_kernel(x_ref, alpha_ref, bias_ref, o_ref, *, eps: float):
    x = x_ref[...].astype(jnp.float32)
    feats = x.shape[-1]
    mean = jnp.mean(x, axis=-1, keepdims=True)
    diff = x - mean
    # torch.Tensor.std() default: unbiased estimator (ddof=1).
    var = jnp.sum(diff * diff, axis=-1, keepdims=True) * jnp.float32(1.0 / (feats - 1))
    std = jnp.sqrt(var)
    # Divide -> reciprocal (EUP) + multiply (VALU). approx=True would be a bit
    # faster but costs ~1e-4 relative error; kept exact to match the reference.
    inv = pl.reciprocal(std + jnp.float32(eps), approx=False)
    alpha = alpha_ref[...].astype(jnp.float32)
    bias = bias_ref[...].astype(jnp.float32)
    out = (diff * inv) * alpha + bias
    o_ref[...] = out.astype(o_ref.dtype)


def pallas_layernorm(x2d, alpha, bias, *, eps: float = 1e-6,
                     tile_rows: int | None = None):
    rows, feats = x2d.shape
    assert feats >= 2, "LayerNormalization needs features >= 2 (unbiased std)"
    tile = _choose_tile_rows(rows, feats, n_streams=2, requested=tile_rows)
    x_pad, padded_rows = _pad_rows(x2d, tile)
    grid = (pl.cdiv(padded_rows, tile),)

    alpha2d = alpha.reshape(1, feats)
    bias2d = bias.reshape(1, feats)
    itemsize = jnp.dtype(x2d.dtype).itemsize

    out = pl.pallas_call(
        functools.partial(_layernorm_kernel, eps=eps),
        out_shape=jax.ShapeDtypeStruct((padded_rows, feats), x2d.dtype),
        grid_spec=pl.GridSpec(
            grid=grid,
            in_specs=[
                pl.BlockSpec((tile, feats), lambda i: (i, 0)),
                pl.BlockSpec((1, feats), lambda i: (0, 0)),  # not re-DMA'd per step
                pl.BlockSpec((1, feats), lambda i: (0, 0)),
            ],
            out_specs=pl.BlockSpec((tile, feats), lambda i: (i, 0)),
        ),
        compiler_params=pltpu.CompilerParams(
            dimension_semantics=("parallel",),
            vmem_limit_bytes=_VMEM_LIMIT_BYTES,
        ),
        cost_estimate=pl.CostEstimate(
            flops=8 * rows * feats,
            transcendentals=2 * rows,
            bytes_accessed=2 * rows * feats * itemsize + 2 * feats * 4,
        ),
    )(x_pad, alpha2d, bias2d)
    return out[:rows] if padded_rows != rows else out


# ---------------------------------------------------------------------------
# Residual add kernel: out = x + y   (dropout is identity in inference mode).
# ---------------------------------------------------------------------------
def _residual_add_kernel(x_ref, y_ref, o_ref):
    o_ref[...] = x_ref[...] + y_ref[...]


def pallas_residual_add(x2d, y2d, *, tile_rows: int | None = None):
    rows, feats = x2d.shape
    tile = _choose_tile_rows(rows, feats, n_streams=3, requested=tile_rows)
    x_pad, padded_rows = _pad_rows(x2d, tile)
    y_pad, _ = _pad_rows(y2d, tile)
    grid = (pl.cdiv(padded_rows, tile),)
    itemsize = jnp.dtype(x2d.dtype).itemsize

    out = pl.pallas_call(
        _residual_add_kernel,
        out_shape=jax.ShapeDtypeStruct((padded_rows, feats), x2d.dtype),
        grid_spec=pl.GridSpec(
            grid=grid,
            in_specs=[
                pl.BlockSpec((tile, feats), lambda i: (i, 0)),
                pl.BlockSpec((tile, feats), lambda i: (i, 0)),
            ],
            out_specs=pl.BlockSpec((tile, feats), lambda i: (i, 0)),
        ),
        compiler_params=pltpu.CompilerParams(
            dimension_semantics=("parallel",),
            vmem_limit_bytes=_VMEM_LIMIT_BYTES,
        ),
        cost_estimate=pl.CostEstimate(
            flops=rows * feats,
            transcendentals=0,
            bytes_accessed=3 * rows * feats * itemsize,
        ),
    )(x_pad, y_pad)
    return out[:rows] if padded_rows != rows else out


# ---------------------------------------------------------------------------
# Module port.
# ---------------------------------------------------------------------------
class ResidualConnectionPallas:
    """JAX/Pallas port of ResidualConnection:
       forward(x, sublayer) = x + dropout(sublayer(norm(x)))."""

    def __init__(self, features: int, dropout: float, eps: float = 1e-6):
        self.features = features
        self.dropout_rate = float(dropout)
        self.eps = eps
        # Deterministic params matching LayerNormalization.__init__.
        self.alpha = jnp.ones((features,), dtype=jnp.float32)
        self.bias = jnp.zeros((features,), dtype=jnp.float32)

    def __call__(self, x, sublayer):
        # TODO(synk): nn.Dropout is applied as inference-mode identity here;
        # training-mode Bernoulli masking (pltpu.prng_*) is not wired in.
        lead, f = x.shape[:-1], x.shape[-1]
        assert f == self.features
        x2d = x.reshape(-1, f)
        normed = pallas_layernorm(x2d, self.alpha, self.bias, eps=self.eps)
        sub_out = sublayer(normed.reshape(*lead, f))
        out2d = pallas_residual_add(x2d, sub_out.reshape(-1, f))
        return out2d.reshape(*lead, f)


def _reference_layernorm(x, alpha, bias, eps=1e-6):
    mean = jnp.mean(x, axis=-1, keepdims=True)
    var = jnp.sum((x - mean) ** 2, axis=-1, keepdims=True) / (x.shape[-1] - 1)
    std = jnp.sqrt(var)
    return alpha * (x - mean) / (std + eps) + bias


if __name__ == "__main__":
    key = jax.random.PRNGKey(0)
    # features=128 keeps the lane dimension dense (full-width vector stores).
    batch, seq, features = 2, 8, 128
    dropout = 0.1
    x = jax.random.normal(key, (batch, seq, features), dtype=jnp.float32)

    # Deterministic stand-in for the externally supplied sublayer callable.
    sublayer = lambda t: jnp.tanh(t)

    block = ResidualConnectionPallas(features, dropout)
    out = block(x, sublayer)
    out = jax.block_until_ready(out)

    ref = x + sublayer(_reference_layernorm(x, block.alpha, block.bias, block.eps))
    assert out.shape == (batch, seq, features)
    assert jnp.allclose(out, ref, atol=1e-5, rtol=1e-5)

    print("KERNEL_OK")
</pallas_src>

<mosaic_0001>
module attributes {stable_mosaic.version = 11 : i64} {
  func.func @_layernorm_kernel(%arg0: i32, %arg1: memref<16x128xf32, #tpu.memory_space<vmem>>, %arg2: memref<1x128xf32, #tpu.memory_space<vmem>>, %arg3: memref<1x128xf32, #tpu.memory_space<vmem>>, %arg4: memref<16x128xf32, #tpu.memory_space<vmem>>) attributes {dimension_semantics = [#tpu.dimension_semantics<parallel>], iteration_bounds = array<i64: 1>, scalar_prefetch = 0 : i64, scratch_operands = 0 : i64, tpu.core_type = #tpu.core_type<tc>, window_params = [{transform_indices = @transform_0, window_bounds = array<i64: 16, 128>}, {pipeline_mode = #tpu.pipeline_mode<synchronous>, transform_indices = @transform_1, window_bounds = array<i64: 1, 128>}, {pipeline_mode = #tpu.pipeline_mode<synchronous>, transform_indices = @transform_2, window_bounds = array<i64: 1, 128>}, {transform_indices = @transform_3, window_bounds = array<i64: 16, 128>}]} {
    %c0 = arith.constant 0 : index
    %c0_0 = arith.constant 0 : index
    %0 = vector.load %arg1[%c0, %c0_0] : memref<16x128xf32, #tpu.memory_space<vmem>>, vector<16x128xf32>
    %cst = arith.constant dense<0.000000e+00> : vector<16xf32>
    %1 = vector.multi_reduction <add>, %0, %cst [1] : vector<16x128xf32> to vector<16xf32>
    %2 = vector.shape_cast %1 : vector<16xf32> to vector<16x1xf32>
    %cst_1 = arith.constant 1.280000e+02 : f32
    %3 = vector.broadcast %cst_1 : f32 to vector<16x1xf32>
    %4 = arith.divf %2, %3 : vector<16x1xf32>
    %5 = vector.broadcast %4 : vector<16x1xf32> to vector<16x128xf32>
    %6 = arith.subf %0, %5 : vector<16x128xf32>
    %7 = arith.mulf %6, %6 : vector<16x128xf32>
    %cst_2 = arith.constant dense<0.000000e+00> : vector<16xf32>
    %8 = vector.multi_reduction <add>, %7, %cst_2 [1] : vector<16x128xf32> to vector<16xf32>
    %9 = vector.shape_cast %8 : vector<16xf32> to vector<16x1xf32>
    %cst_3 = arith.constant 0.00787401571 : f32
    %10 = vector.broadcast %cst_3 : f32 to vector<16x1xf32>
    %11 = arith.mulf %9, %10 : vector<16x1xf32>
    %12 = math.sqrt %11 : vector<16x1xf32>
    %cst_4 = arith.constant 9.99999997E-7 : f32
    %13 = vector.broadcast %cst_4 : f32 to vector<16x1xf32>
    %14 = arith.addf %12, %13 : vector<16x1xf32>
    %15 = tpu.reciprocal %14 : vector<16x1xf32> -> vector<16x1xf32>
    %c0_5 = arith.constant 0 : index
    %c0_6 = arith.constant 0 : index
    %16 = vector.load %arg2[%c0_5, %c0_6] : memref<1x128xf32, #tpu.memory_space<vmem>>, vector<1x128xf32>
    %c0_7 = arith.constant 0 : index
    %c0_8 = arith.constant 0 : index
    %17 = vector.load %arg3[%c0_7, %c0_8] : memref<1x128xf32, #tpu.memory_space<vmem>>, vector<1x128xf32>
    %18 = vector.broadcast %15 : vector<16x1xf32> to vector<16x128xf32>
    %19 = arith.mulf %6, %18 : vector<16x128xf32>
    %20 = vector.broadcast %16 : vector<1x128xf32> to vector<16x128xf32>
    %21 = arith.mulf %19, %20 : vector<16x128xf32>
    %22 = vector.broadcast %17 : vector<1x128xf32> to vector<16x128xf32>
    %23 = arith.addf %21, %22 : vector<16x128xf32>
    %c0_9 = arith.constant 0 : index
    %c0_10 = arith.constant 0 : index
    %24 = vector.load %arg4[%c0_9, %c0_10] : memref<16x128xf32, #tpu.memory_space<vmem>>, vector<16x128xf32>
    tpu.vector_store %arg4[%c0_9, %c0_10], %23 {strides = array<i32>} : memref<16x128xf32, #tpu.memory_space<vmem>>, vector<16x128xf32>,
    return
  }
  func.func @transform_0(%arg0: i32) -> (i32, i32) {
    %c0_i32 = arith.constant 0 : i32
    %c0_i32_0 = arith.constant 0 : i32
    return %arg0, %c0_i32 : i32, i32
  }
  func.func @transform_1(%arg0: i32) -> (i32, i32) {
    %c0_i32 = arith.constant 0 : i32
    %c0_i32_0 = arith.constant 0 : i32
    %c0_i32_1 = arith.constant 0 : i32
    return %c0_i32, %c0_i32_0 : i32, i32
  }
  func.func @transform_2(%arg0: i32) -> (i32, i32) {
    %c0_i32 = arith.constant 0 : i32
    %c0_i32_0 = arith.constant 0 : i32
    %c0_i32_1 = arith.constant 0 : i32
    return %c0_i32, %c0_i32_0 : i32, i32
  }
  func.func @transform_3(%arg0: i32) -> (i32, i32) {
    %c0_i32 = arith.constant 0 : i32
    %c0_i32_0 = arith.constant 0 : i32
    return %arg0, %c0_i32 : i32, i32
  }
}

</mosaic_0001>

<llo_original>
// kernel: tpu_custom_call.1
$region0: #{tpu_custom_call.1}
  #allocation0 [shape = 'u32[]', space=smem, size = 0x4, offset = 0x4, fixed_abs, tag = 'smem constant byte address 0x4 - core index']
  #allocation1 [shape = 'u32[144,128]{1,0:T(1,128)}', space=vmem, size = 0x12000, scoped, tag = 'internal scratch']
  %s0 = inlined_call_operand.hbm [shape: f32[16,128], index: 0, kind: input, shape index: {}]
  %s1 = inlined_call_operand.vmem [shape: f32[1,128], index: 1, kind: input, shape index: {}]
  %s2 = inlined_call_operand.vmem [shape: f32[1,128], index: 2, kind: input, shape index: {}]
  %s3 = inlined_call_operand.hbm [shape: f32[16,128], index: 3, kind: output, shape index: {}]
  %s4 = sld [smem:[#allocation0]]
  $region26: #{tpu_custom_call.1} parent=0
    _
  %s6 = ssub.s32 1, %s4
  %s7 = scalar_select 0, %s6, %s4
  $region1: #{tpu_custom_call.1} parent=0
    #allocation2 [shape = 'u8[8192]{0}', space=vmem, size = 0x2000, scoped, tag = 'input window, operand 0, single buffered']
    #allocation3 [shape = 's32[1]{0}', space=sflag, size = 0x4, scoped, tag = 'scoped memory for tpu_custom_call.1']
    #allocation4 [shape = 's32[1]{0}', space=sflag, size = 0x4, scoped, tag = 'scoped memory for tpu_custom_call.1']
    #allocation5 [shape = 'u8[8192]{0}', space=vmem, size = 0x2000, scoped, tag = 'output window, operand 0, single buffered']
    %8 = vsyncpa [#allocation3], 0
    %9 = vsyncpa [#allocation4], 0
    // Predicated region
    $region2: #{tpu_custom_call.1} parent=1 // pred_check
      _
    $region3: #{tpu_custom_call.1} parent=1 // pred_check_branch
      %11 = sbr.rel (0) target = $region5
    $region4: #{tpu_custom_call.1} parent=1 // pred_region
      %s13 = ssub.s32 256, 256
      %14 = vsyncadd [#allocation3], %s13
      %s15 = sshll.u32 [#allocation2], 4
      %s16 = int_to_ptr.vmem [resolvable:$true] %s15
      %21 = dma.hbm_to_vmem [thread:$0]  %s0, 256, %s16, [#allocation3], 128, 128, 8
    $region5: #{tpu_custom_call.1} parent=1 // pred_fallthru
      _
    // Predicated region
    $region6: #{tpu_custom_call.1} parent=1 // pred_check
      _
    $region7: #{tpu_custom_call.1} parent=1 // pred_check_branch
      %23 = sbr.rel (0) target = $region9
    $region8: #{tpu_custom_call.1} parent=1 // pred_region
      _
    $region9: #{tpu_custom_call.1} parent=1 // pred_fallthru
      _
    // Predicated region
    $region10: #{tpu_custom_call.1} parent=1 // pred_check
      _
    $region11: #{tpu_custom_call.1} parent=1 // pred_check_branch
      %25 = sbr.rel (0) target = $region13
    $region12: #{tpu_custom_call.1} parent=1 // pred_region
      _
    $region13: #{tpu_custom_call.1} parent=1 // pred_fallthru
      _
    // Predicated region
    $region14: #{tpu_custom_call.1} parent=1 // pred_check
      _
    $region15: #{tpu_custom_call.1} parent=1 // pred_check_branch
      %27 = sbr.rel (0) target = $region17
    $region16: #{tpu_custom_call.1} parent=1 // pred_region
      %28 = dma.done [#allocation3], 256
    $region17: #{tpu_custom_call.1} parent=1 // pred_fallthru
      _
    %v29 = vld [vmem:[#allocation2] sm:$0xff]
    %v30 = vld [vmem:[#allocation2 + $0x8] sm:$0xff]
    %31 = vadd.xlane.f32.xlu0 %v29
    %v32 = vpop.xlane.xlu0 %31
    %33 = vadd.xlane.f32.xlu0 %v30
    %v34 = vpop.xlane.xlu0 %33
    %v35 = vrcp.pop 128.0
    %v36 = vmul.f32 %v32, %v35
    %v37 = vmul.f32 %v34, %v35
    %v38 = vsub.f32 %v29, %v36
    %v39 = vsub.f32 %v30, %v37
    %v40 = vmul.f32 %v38, %v38
    %v41 = vmul.f32 %v39, %v39
    %42 = vadd.xlane.f32.xlu0 %v40
    %v43 = vpop.xlane.xlu0 %42
    %44 = vadd.xlane.f32.xlu0 %v41
    %v45 = vpop.xlane.xlu0 %44
    %v46 = vmul.f32 %v43, 0.007874016
    %v47 = vmul.f32 %v45, 0.007874016
    %v48 = vrsqrt.pop %v46
    %v49 = vmul.f32 %v46, %v48
    %vm50 = vcmp.eq.f32.partialorder %v46, inf
    %v51 = vsel %vm50, %v46, %v49
    %vm52 = vcmp.eq.f32.partialorder %v46, 0.0
    %v53 = vand.u32 %v46, 2147483648
    %v54 = vsel %vm52, %v53, %v51
    %v55 = vrsqrt.pop %v47
    %v56 = vmul.f32 %v47, %v55
    %vm57 = vcmp.eq.f32.partialorder %v47, inf
    %v58 = vsel %vm57, %v47, %v56
    %vm59 = vcmp.eq.f32.partialorder %v47, 0.0
    %v60 = vand.u32 %v47, 2147483648
    %v61 = vsel %vm59, %v60, %v58
    %v62 = vadd.f32 %v54, 1e-06
    %v63 = vadd.f32 %v61, 1e-06
    %v64 = vrcp.pop %v62
    %v65 = vrcp.pop %v63
    %v66 = vld [vmem:[%s1] sm:$0x1]
    %v67 = vld [vmem:[%s2] sm:$0x1]
    %v68 = vmul.f32 %v38, %v64
    %v69 = vmul.f32 %v39, %v65
    %v71 = vlaneseq
    %v72 = vshrl.u32 %v71, 7
    %v73 = vsub.s32 0, %v72
    %v74 = vrot.slane %v66, %v73
    %v76 = vmul.f32 %v68, %v74
    %v77 = vmul.f32 %v69, %v74
    %v79 = vlaneseq
    %v80 = vshrl.u32 %v79, 7
    %v81 = vsub.s32 0, %v80
    %v82 = vrot.slane %v67, %v81
    %v84 = vadd.f32 %v76, %v82
    %v85 = vadd.f32 %v77, %v82
    %86 = vst [vmem:[#allocation5] sm:$0xff] %v84
    %87 = vst [vmem:[#allocation5 + $0x8] sm:$0xff] %v85
    // Predicated region
    $region18: #{tpu_custom_call.1} parent=1 // pred_check
      _
    $region19: #{tpu_custom_call.1} parent=1 // pred_check_branch
      %89 = sbr.rel (0) target = $region21
    $region20: #{tpu_custom_call.1} parent=1 // pred_region
      %s91 = ssub.s32 256, 256
      %92 = vsyncadd [#allocation4], %s91
      %s93 = sshll.u32 [#allocation5], 4
      %s94 = int_to_ptr.vmem [resolvable:$true] %s93
      %99 = dma.vmem_to_hbm [thread:$0]  %s94, 256, %s3, [#allocation4], 128, 128, 8
    $region21: #{tpu_custom_call.1} parent=1 // pred_fallthru
      _
    // Predicated region
    $region22: #{tpu_custom_call.1} parent=1 // pred_check
      _
    $region23: #{tpu_custom_call.1} parent=1 // pred_check_branch
      %101 = sbr.rel (0) target = $region25
    $region24: #{tpu_custom_call.1} parent=1 // pred_region
      %102 = dma.done [#allocation4], 256
    $region25: #{tpu_custom_call.1} parent=1 // pred_fallthru
      _
    %103 = vsyncpa [#allocation3], 1
    %104 = vsyncpa [#allocation4], 1

</llo_original>
